<compile_context>
chip_gen: v6e
topology: v6e:2x2x1
jax: 0.10.0
libtpu: 0.0.40
codegen_flags: <defaults>
</compile_context>

<pallas_src>
import jax
import jax.numpy as jnp
from jax.experimental import pallas as pl
from jax.experimental.pallas import tpu as pltpu


def _round_up(a, m):
    return ((a + m - 1) // m) * m


def _split3_kernel(x_ref, o0_ref, o1_ref, o2_ref):
    # x_ref : (TN, 3, TL) -- one (batch-tile, all 3 channels, lane-tile) block
    # o*_ref: (TN, TL)    -- per-channel split outputs, lane-dense stores
    o0_ref[...] = x_ref[:, 0, :]
    o1_ref[...] = x_ref[:, 1, :]
    o2_ref[...] = x_ref[:, 2, :]


def split_cat_forward(v1):
    """Returns (concatenated_tensor, (split0, split1, split2)).

    concatenated == v1 exactly (cat of a [1,1,1] split along dim=1), so it is
    returned without any data movement; only the splits go through the kernel.
    """
    N, C, H, W = v1.shape
    assert C == 3, "module splits dim=1 into [1, 1, 1] -> needs 3 channels"
    L = H * W
    dt = v1.dtype
    itemsize = jnp.dtype(dt).itemsize

    x = v1.reshape(N, C, L)  # free reshape; last dim L is lane-dense

    # ---- tile selection -------------------------------------------------
    # Sublane packing: 8 rows/vreg for 32-bit, 16 for bf16, 32 for int8/fp8.
    sub_pad = 32 // itemsize
    # Per grid step (double-buffered) the blocks occupy roughly:
    #   2 * TN * (sub_pad  +  3) * TL_pad * itemsize
    #          ^input(3->sub_pad) ^3 outputs of (TN, TL)
    factor = sub_pad + 3
    budget = 14 << 20          # total double-buffered block bytes per step

    min_tn = min(N, 8)
    l_pad = _round_up(L, 128)

    if 2 * min_tn * factor * l_pad * itemsize <= budget:
        TL = L                                           # full lane extent
    else:
        tl_cap = budget // (2 * min_tn * factor * itemsize)
        TL = max(128, (tl_cap // 128) * 128)             # lane tile, mult of 128
    tl_pad = _round_up(min(TL, L), 128)

    if N <= 8:
        TN = N                                           # == full dim, valid
    else:
        tn_cap = budget // (2 * factor * tl_pad * itemsize)
        TN = min(N, max(8, (tn_cap // 8) * 8))           # multiple of 8 (or N)

    # Force >= 2 grid steps when possible so both TensorCores (v7x megacore)
    # can drive DMA on this bandwidth-bound copy.
    if pl.cdiv(N, TN) * pl.cdiv(L, TL) < 2:
        if N >= 16:
            TN = max(8, (N // 16) * 8)                   # ~half batch, mult 8
        elif L >= 256:
            TL = max(128, (L // 256) * 128)              # ~half lanes, mult 128

    grid = (pl.cdiv(N, TN), pl.cdiv(L, TL))

    out0, out1, out2 = pl.pallas_call(
        _split3_kernel,
        out_shape=tuple(jax.ShapeDtypeStruct((N, L), dt) for _ in range(3)),
        grid=grid,
        in_specs=[pl.BlockSpec((TN, C, TL), lambda n, l: (n, 0, l))],
        out_specs=tuple(
            pl.BlockSpec((TN, TL), lambda n, l: (n, l)) for _ in range(3)
        ),
        compiler_params=pltpu.CompilerParams(
            dimension_semantics=("parallel", "parallel"),
            vmem_limit_bytes=32 << 20,
        ),
        cost_estimate=pl.CostEstimate(
            flops=0,
            transcendentals=0,
            bytes_accessed=2 * N * C * L * itemsize,
        ),
    )(x)

    # (N, L) -> (N, 1, H, W) is a contiguous (free) reshape.
    splits = tuple(o.reshape(N, 1, H, W) for o in (out0, out1, out2))
    concatenated = v1  # cat(split(v1, [1,1,1], 1), 1) == v1, value-identical
    return concatenated, splits


if __name__ == "__main__":
    key = jax.random.PRNGKey(0)
    # dim=1 must be 3 (split sizes [1, 1, 1]); H*W = 256 -> lane-dense last dim.
    x = jax.random.normal(key, (2, 3, 16, 16), dtype=jnp.float32)

    fwd = jax.jit(split_cat_forward)
    cat, splits = fwd(x)
    jax.block_until_ready((cat, splits))

    # Correctness checks against the reference semantics.
    assert cat.shape == x.shape
    assert jnp.array_equal(cat, x)
    for c, s in enumerate(splits):
        assert s.shape == (2, 1, 16, 16)
        assert jnp.array_equal(s, x[:, c:c + 1])

    print("KERNEL_OK")
</pallas_src>

<mosaic_0001>
module attributes {stable_mosaic.version = 11 : i64} {
  func.func @_split3_kernel(%arg0: i32, %arg1: i32, %arg2: memref<2x3x128xf32, #tpu.memory_space<vmem>>, %arg3: memref<2x128xf32, #tpu.memory_space<vmem>>, %arg4: memref<2x128xf32, #tpu.memory_space<vmem>>, %arg5: memref<2x128xf32, #tpu.memory_space<vmem>>) attributes {dimension_semantics = [#tpu.dimension_semantics<parallel>, #tpu.dimension_semantics<parallel>], iteration_bounds = array<i64: 1, 2>, scalar_prefetch = 0 : i64, scratch_operands = 0 : i64, tpu.core_type = #tpu.core_type<tc>, window_params = [{transform_indices = @transform_0, window_bounds = array<i64: 2, 3, 128>}, {transform_indices = @transform_1, window_bounds = array<i64: 2, 128>}, {transform_indices = @transform_2, window_bounds = array<i64: 2, 128>}, {transform_indices = @transform_3, window_bounds = array<i64: 2, 128>}]} {
    %c0 = arith.constant 0 : index
    %c0_0 = arith.constant 0 : index
    %c0_1 = arith.constant 0 : index
    %0 = vector.load %arg2[%c0, %c0_0, %c0_1] : memref<2x3x128xf32, #tpu.memory_space<vmem>>, vector<2x1x128xf32>
    %1 = vector.shape_cast %0 : vector<2x1x128xf32> to vector<2x128xf32>
    %c0_2 = arith.constant 0 : index
    %c0_3 = arith.constant 0 : index
    %2 = vector.load %arg3[%c0_2, %c0_3] : memref<2x128xf32, #tpu.memory_space<vmem>>, vector<2x128xf32>
    tpu.vector_store %arg3[%c0_2, %c0_3], %1 {strides = array<i32>} : memref<2x128xf32, #tpu.memory_space<vmem>>, vector<2x128xf32>,
    %c0_4 = arith.constant 0 : index
    %c1 = arith.constant 1 : index
    %c0_5 = arith.constant 0 : index
    %3 = vector.load %arg2[%c0_4, %c1, %c0_5] : memref<2x3x128xf32, #tpu.memory_space<vmem>>, vector<2x1x128xf32>
    %4 = vector.shape_cast %3 : vector<2x1x128xf32> to vector<2x128xf32>
    %c0_6 = arith.constant 0 : index
    %c0_7 = arith.constant 0 : index
    %5 = vector.load %arg4[%c0_6, %c0_7] : memref<2x128xf32, #tpu.memory_space<vmem>>, vector<2x128xf32>
    tpu.vector_store %arg4[%c0_6, %c0_7], %4 {strides = array<i32>} : memref<2x128xf32, #tpu.memory_space<vmem>>, vector<2x128xf32>,
    %c0_8 = arith.constant 0 : index
    %c2 = arith.constant 2 : index
    %c0_9 = arith.constant 0 : index
    %6 = vector.load %arg2[%c0_8, %c2, %c0_9] : memref<2x3x128xf32, #tpu.memory_space<vmem>>, vector<2x1x128xf32>
    %7 = vector.shape_cast %6 : vector<2x1x128xf32> to vector<2x128xf32>
    %c0_10 = arith.constant 0 : index
    %c0_11 = arith.constant 0 : index
    %8 = vector.load %arg5[%c0_10, %c0_11] : memref<2x128xf32, #tpu.memory_space<vmem>>, vector<2x128xf32>
    tpu.vector_store %arg5[%c0_10, %c0_11], %7 {strides = array<i32>} : memref<2x128xf32, #tpu.memory_space<vmem>>, vector<2x128xf32>,
    return
  }
  func.func @transform_0(%arg0: i32, %arg1: i32) -> (i32, i32, i32) {
    %c0_i32 = arith.constant 0 : i32
    %c0_i32_0 = arith.constant 0 : i32
    return %arg0, %c0_i32, %arg1 : i32, i32, i32
  }
  func.func @transform_1(%arg0: i32, %arg1: i32) -> (i32, i32) {
    %c0_i32 = arith.constant 0 : i32
    return %arg0, %arg1 : i32, i32
  }
  func.func @transform_2(%arg0: i32, %arg1: i32) -> (i32, i32) {
    %c0_i32 = arith.constant 0 : i32
    return %arg0, %arg1 : i32, i32
  }
  func.func @transform_3(%arg0: i32, %arg1: i32) -> (i32, i32) {
    %c0_i32 = arith.constant 0 : i32
    return %arg0, %arg1 : i32, i32
  }
}

</mosaic_0001>

<llo_original>
// kernel: split_cat_forward.1
$region0: #{split_cat_forward.1}
  #allocation0 [shape = 'u32[]', space=smem, size = 0x4, offset = 0x4, fixed_abs, tag = 'smem constant byte address 0x4 - core index']
  #allocation1 [shape = 'u32[144,128]{1,0:T(1,128)}', space=vmem, size = 0x12000, scoped, tag = 'internal scratch']
  %s0 = inlined_call_operand.vmem [shape: f32[2,3,256], index: 0, kind: input, shape index: {}]
  %s1 = inlined_call_operand.vmem [shape: f32[2,256], index: 1, kind: output, shape index: {0}]
  %s2 = inlined_call_operand.vmem [shape: f32[2,256], index: 2, kind: output, shape index: {1}]
  %s3 = inlined_call_operand.vmem [shape: f32[2,256], index: 3, kind: output, shape index: {2}]
  %4 = xla_tuple %s1, %s2, %s3
  %s5 = sld [smem:[#allocation0]]
  $region94: #{split_cat_forward.1} parent=0
    _
  %s7 = ssub.s32 1, %s5
  %s8 = scalar_select 0, %s7, %s5
  $region1: #{split_cat_forward.1} parent=0
    #allocation2 [shape = 'u8[8192]{0}', space=vmem, size = 0x2000, scoped, tag = 'input window, operand 0']
    loop: start=0, step=1, limit=4
    $region2: #{split_cat_forward.1} parent=1 // loop_pre_header
      _
    $region3: #{split_cat_forward.1} parent=1 // loop_header
      %s10 = sphi 0, %s14
      %p11 = scmp.ge.s32.totalorder %s10, 4
      %s17 = sphi 0, %s29
      %s18 = sphi 0, %s25
      %s19 = sphi 0, %s17
      %s20 = sphi 0, %s18
      %s21 = sphi 0, %s19
      %s22 = sphi 0, %s20
      %s34 = sphi 0, %s36
      %s37 = sphi 0, %s34
      %s38 = sphi 0, %s37
      %s54 = sphi 0, %s38
      %s62 = sphi 0, %s64
      %s65 = sphi 0, %s62
      %s66 = sphi 0, %s65
      %s82 = sphi 0, %s66
      %s90 = sphi 0, %s92
      %s93 = sphi 0, %s90
      %s94 = sphi 0, %s93
      %s110 = sphi 0, %s94
      %s118 = sphi 0, %s120
      %s121 = sphi 0, %s118
      %s122 = sphi 0, %s121
      %s138 = sphi 0, %s122
    $region4: #{split_cat_forward.1} parent=1 // loop_header_branch
      %13 = sbr.rel (%p11) target = $region8
    $region5: #{split_cat_forward.1} parent=1 // loop_body
      %s15 = ssub.s32 %s10, 1
      %s16 = ssub.s32 %s10, 2
      %s23 = sadd.s32 1, %s18
      %p24 = scmp.ge.s32.totalorder %s23, 2
      %s25 = scalar_select %p24, 0, %s23
      %s26 = sadd.s32 1, %s17
      %s27 = scalar_select %p24, %s26, %s17
      %p28 = scmp.ge.s32.totalorder %s27, 1
      %s29 = scalar_select %p28, 0, %s27
      %s30 = ssub.s32 %s17, %s29
      %s31 = ssub.s32 %s18, %s25
      %s32 = sor.u32 %s30, %s31
      %p33 = scmp.eq.s32.totalorder %s32, 0
      %s35 = sadd.s32 %s34, 1
      %s36 = scalar_select %p33, %s34, %s35
      %p39 = pneg %p33
      %p40 = scmp.eq.s32.totalorder %s10, 1
      %p41 = por %p39, %p40
      %p42 = scmp.ne.s32.totalorder %s34, %s37
      %p43 = scmp.eq.s32.totalorder %s10, 0
      %p44 = por %p42, %p43
      %p45 = scmp.ne.s32.totalorder %s34, %s37
      %p46 = scmp.eq.s32.totalorder %s15, 1
      %p47 = por %p45, %p46
      %p48 = scmp.ne.s32.totalorder %s37, %s38
      %p49 = scmp.eq.s32.totalorder %s15, 0
      %p50 = por %p48, %p49
      %p51 = scmp.ne.s32.totalorder %s37, %s38
      %p52 = scmp.eq.s32.totalorder %s16, 1
      %p53 = por %p51, %p52
      %p55 = scmp.ne.s32.totalorder %s38, %s54
      %p56 = scmp.eq.s32.totalorder %s16, 0
      %p57 = por %p55, %p56
      %s58 = ssub.s32 %s17, %s29
      %s59 = ssub.s32 %s18, %s25
      %s60 = sor.u32 %s58, %s59
      %p61 = scmp.eq.s32.totalorder %s60, 0
      %s63 = sadd.s32 %s62, 1
      %s64 = scalar_select %p61, %s62, %s63
      %p67 = pneg %p61
      %p68 = scmp.eq.s32.totalorder %s10, 1
      %p69 = por %p67, %p68
      %p70 = scmp.ne.s32.totalorder %s62, %s65
      %p71 = scmp.eq.s32.totalorder %s10, 0
      %p72 = por %p70, %p71
      %p73 = scmp.ne.s32.totalorder %s62, %s65
      %p74 = scmp.eq.s32.totalorder %s15, 1
      %p75 = por %p73, %p74
      %p76 = scmp.ne.s32.totalorder %s65, %s66
      %p77 = scmp.eq.s32.totalorder %s15, 0
      %p78 = por %p76, %p77
      %p79 = scmp.ne.s32.totalorder %s65, %s66
      %p80 = scmp.eq.s32.totalorder %s16, 1
      %p81 = por %p79, %p80
      %p83 = scmp.ne.s32.totalorder %s66, %s82
      %p84 = scmp.eq.s32.totalorder %s16, 0
      %p85 = por %p83, %p84
      %s86 = ssub.s32 %s17, %s29
      %s87 = ssub.s32 %s18, %s25
      %s88 = sor.u32 %s86, %s87
      %p89 = scmp.eq.s32.totalorder %s88, 0
      %s91 = sadd.s32 %s90, 1
      %s92 = scalar_select %p89, %s90, %s91
      %p95 = pneg %p89
      %p96 = scmp.eq.s32.totalorder %s10, 1
      %p97 = por %p95, %p96
      %p98 = scmp.ne.s32.totalorder %s90, %s93
      %p99 = scmp.eq.s32.totalorder %s10, 0
      %p100 = por %p98, %p99
      %p101 = scmp.ne.s32.totalorder %s90, %s93
      %p102 = scmp.eq.s32.totalorder %s15, 1
      %p103 = por %p101, %p102
      %p104 = scmp.ne.s32.totalorder %s93, %s94
      %p105 = scmp.eq.s32.totalorder %s15, 0
      %p106 = por %p104, %p105
      %p107 = scmp.ne.s32.totalorder %s93, %s94
      %p108 = scmp.eq.s32.totalorder %s16, 1
      %p109 = por %p107, %p108
      %p111 = scmp.ne.s32.totalorder %s94, %s110
      %p112 = scmp.eq.s32.totalorder %s16, 0
      %p113 = por %p111, %p112
      %s114 = ssub.s32 %s17, %s29
      %s115 = ssub.s32 %s18, %s25
      %s116 = sor.u32 %s114, %s115
      %p117 = scmp.eq.s32.totalorder %s116, 0
      %s119 = sadd.s32 %s118, 1
      %s120 = scalar_select %p117, %s118, %s119
      %p123 = pneg %p117
      %p124 = scmp.eq.s32.totalorder %s10, 1
      %p125 = por %p123, %p124
      %p126 = scmp.ne.s32.totalorder %s118, %s121
      %p127 = scmp.eq.s32.totalorder %s10, 0
      %p128 = por %p126, %p127
      %p129 = scmp.ne.s32.totalorder %s118, %s121
      %p130 = scmp.eq.s32.totalorder %s15, 1
      %p131 = por %p129, %p130
      %p132 = scmp.ne.s32.totalorder %s121, %s122
      %p133 = scmp.eq.s32.totalorder %s15, 0
      %p134 = por %p132, %p133
      %p135 = scmp.ne.s32.totalorder %s121, %s122
      %p136 = scmp.eq.s32.totalorder %s16, 1
      %p137 = por %p135, %p136
      %p139 = scmp.ne.s32.totalorder %s122, %s138
      %p140 = scmp.eq.s32.totalorder %s16, 0
      %p141 = por %p139, %p140
      %p142 = scmp.le.s32.totalorder 1, %s10
      %p143 = scmp.lt.s32.totalorder %s10, 3
      %p144 = pnand %p142, %p143
      %p145 = pneg %p144
      // Predicated region
      $region9: #{split_cat_forward.1} parent=5 // pred_check
        _
      $region10: #{split_cat_forward.1} parent=5 // pred_check_branch
        %147 = sbr.rel (%p144) target = $region12
      $region11: #{split_cat_forward.1} parent=5 // pred_region
        %s148 = ssub.s32 %s10, 1
      $region12: #{split_cat_forward.1} parent=5 // pred_fallthru
        _
      %p149 = scmp.lt.s32.totalorder %s10, 2
      // Predicated region
      $region13: #{split_cat_forward.1} parent=5 // pred_check
        %p150 = pneg %p149
      $region14: #{split_cat_forward.1} parent=5 // pred_check_branch
        %152 = sbr.rel (%p150) target = $region16
      $region15: #{split_cat_forward.1} parent=5 // pred_region
        // Predicated region
        $region17: #{split_cat_forward.1} parent=15 // pred_check
          %p153 = pneg %p44
        $region18: #{split_cat_forward.1} parent=15 // pred_check_branch
          %155 = sbr.rel (%p153) target = $region20
        $region19: #{split_cat_forward.1} parent=15 // pred_region
          %s156 = sand.u32 %s34, 1
          %s157 = sand.u32 %s34, 1
          %s158 = smul.addr %s157, 8
          %s159 = scalar_lea.vmem [#allocation2], %s158
          %s160 = smul.u32 2, %s17
          %s161 = smul.addr %s160, 2
          %s162 = sadd.s32 %s18, %s161
          %s163 = smul.addr %s162, 4
          %s164 = scalar_lea.vmem %s0, %s163
          // Predicated region
          $region21: #{split_cat_forward.1} parent=19 // pred_check
            _
          $region22: #{split_cat_forward.1} parent=19 // pred_check_branch
            %166 = sbr.rel (0) target = $region24
          $region23: #{split_cat_forward.1} parent=19 // pred_region
            // Predicated region
            $region25: #{split_cat_forward.1} parent=23 // pred_check
              _
            $region26: #{split_cat_forward.1} parent=23 // pred_check_branch
              %168 = sbr.rel target = $region28
            $region27: #{split_cat_forward.1} parent=23 // pred_region
              // Predicated region
              $region40: #{split_cat_forward.1} parent=27 // pred_check
                _
              $region41: #{split_cat_forward.1} parent=27 // pred_check_branch
                %186 = sbr.rel (0) target = $region43
              $region42: #{split_cat_forward.1} parent=27 // pred_region
                loop: start=0, step=1, limit=1
                $region44: #{split_cat_forward.1} parent=42 // loop_pre_header
                  _
                $region45: #{split_cat_forward.1} parent=42 // loop_header
                  %s188 = sphi 0, %s192
                  %p189 = scmp.ge.s32.totalorder %s188, 1
                  %s193 = sphi %s164, %s164
                  %s194 = sphi %s159, %s159
                $region46: #{split_cat_forward.1} parent=42 // loop_header_branch
                  %191 = sbr.rel (%p189) target = $region50
                $region47: #{split_cat_forward.1} parent=42 // loop_body
                  _
                $region48: #{split_cat_forward.1} parent=42 // loop_footer
                  %s192 = sadd.s32 1, %s188
                $region49: #{split_cat_forward.1} parent=42 // loop_footer_branch
                  %187 = sbr.rel target = $region45
                $region50: #{split_cat_forward.1} parent=42 // loop_exit
                  _
                %s196 = ssub.s32 16, 1
                loop: start=0, step=1, limit=1
                $region51: #{split_cat_forward.1} parent=42 // loop_pre_header
                  _
                $region52: #{split_cat_forward.1} parent=42 // loop_header
                  %s198 = sphi 0, %s202
                  %p199 = scmp.ge.s32.totalorder %s198, 1
                  %s203 = sphi %s164, %s164
                  %s204 = sphi %s159, %s159
                $region53: #{split_cat_forward.1} parent=42 // loop_header_branch
                  %201 = sbr.rel (%p199) target = $region57
                $region54: #{split_cat_forward.1} parent=42 // loop_body
                  %v205 = vld [vmem:[%s203] sm:%s196]
                  %206 = vst [vmem:[%s204] sm:%s196] %v205
                  %v207 = vld [vmem:[%s203 + $0x8] sm:%s196]
                  %208 = vst [vmem:[%s204 + $0x4] sm:%s196] %v207
                $region55: #{split_cat_forward.1} parent=42 // loop_footer
                  %s202 = sadd.s32 1, %s198
                $region56: #{split_cat_forward.1} parent=42 // loop_footer_branch
                  %197 = sbr.rel target = $region52
                $region57: #{split_cat_forward.1} parent=42 // loop_exit
                  _
              $region43: #{split_cat_forward.1} parent=27 // pred_fallthru
                _
            $region28: #{split_cat_forward.1} parent=23 // pred_fallthru
              _
            // Predicated region
            $region29: #{split_cat_forward.1} parent=23 // pred_check
              _
            $region30: #{split_cat_forward.1} parent=23 // pred_check_branch
              %170 = sbr.rel (0) target = $region32
            $region31: #{split_cat_forward.1} parent=23 // pred_region
              %s172 = ssub.s32 16, 1
              loop: start=0, step=1, limit=1
              $region33: #{split_cat_forward.1} parent=31 // loop_pre_header
                _
              $region34: #{split_cat_forward.1} parent=31 // loop_header
                %s174 = sphi 0, %s178
                %p175 = scmp.ge.s32.totalorder %s174, 1
                %s179 = sphi %s164, %s164
                %s180 = sphi %s159, %s159
              $region35: #{split_cat_forward.1} parent=31 // loop_header_branch
                %177 = sbr.rel (%p175) target = $region39
              $region36: #{split_cat_forward.1} parent=31 // loop_body
                %v181 = vld [vmem:[%s179] sm:%s172]
                %182 = vst [vmem:[%s180] sm:%s172] %v181
                %v183 = vld [vmem:[%s179 + $0x8] sm:%s172]
                %184 = vst [vmem:[%s180 + $0x4] sm:%s172] %v183
              $region37: #{split_cat_forward.1} parent=31 // loop_footer
                %s178 = sadd.s32 1, %s174
              $region38: #{split_cat_forward.1} parent=31 // loop_footer_branch
                %173 = sbr.rel target = $region34
              $region39: #{split_cat_forward.1} parent=31 // loop_exit
                _
            $region32: #{split_cat_forward.1} parent=23 // pred_fallthru
              _
          $region24: #{split_cat_forward.1} parent=19 // pred_fallthru
            _
          %209 = vnop
        $region20: #{split_cat_forward.1} parent=15 // pred_fallthru
          _
      $region16: #{split_cat_forward.1} parent=5 // pred_fallthru
        _
      %p210 = scmp.le.s32.totalorder 1, %s10
      %p211 = scmp.lt.s32.totalorder %s10, 3
      %p212 = pnand %p210, %p211
      %p213 = pneg %p212
      // Predicated region
      $region58: #{split_cat_forward.1} parent=5 // pred_check
        _
      $region59: #{split_cat_forward.1} parent=5 // pred_check_branch
        %215 = sbr.rel (%p212) target = $region61
      $region60: #{split_cat_forward.1} parent=5 // pred_region
        %s216 = ssub.s32 %s10, 1
        %s217 = sand.u32 %s37, 1
        %s218 = sand.u32 %s37, 1
        %s219 = smul.addr %s218, 8
        %s220 = scalar_lea.vmem [#allocation2], %s219
        // Predicated region
        $region62: #{split_cat_forward.1} parent=60 // pred_check
          %p221 = pneg %p50
        $region63: #{split_cat_forward.1} parent=60 // pred_check_branch
          %223 = sbr.rel (%p221) target = $region65
        $region64: #{split_cat_forward.1} parent=60 // pred_region
          _
        $region65: #{split_cat_forward.1} parent=60 // pred_fallthru
          _
        %s224 = sand.u32 %s37, 1
        %s225 = sand.u32 %s37, 1
        %s226 = smul.addr %s225, 8
        %s227 = scalar_lea.vmem [#allocation2], %s226
        %p228 = pneg %p50
        %p229 = pneg %p47
        %p230 = pneg %p78
        %p231 = pneg %p75
        %p232 = scmp.lt.s32.totalorder %s19, 0
        %s233 = scalar_select %p232, %s19, 0
        %p234 = scmp.lt.s32.totalorder %s20, 1
        %s235 = scalar_select %p234, %s20, 1
        %s236 = smul.addr %s233, 2
        %s237 = sadd.s32 %s235, %s236
        %s238 = smul.addr %s237, 2
        %s239 = scalar_lea.vmem %s1, %s238
        %p240 = pneg %p106
        %p241 = pneg %p103
        %p242 = scmp.lt.s32.totalorder %s19, 0
        %s243 = scalar_select %p242, %s19, 0
        %p244 = scmp.lt.s32.totalorder %s20, 1
        %s245 = scalar_select %p244, %s20, 1
        %s246 = smul.addr %s243, 2
        %s247 = sadd.s32 %s245, %s246
        %s248 = smul.addr %s247, 2
        %s249 = scalar_lea.vmem %s2, %s248
        %p250 = pneg %p134
        %p251 = pneg %p131
        %p252 = scmp.lt.s32.totalorder %s19, 0
        %s253 = scalar_select %p252, %s19, 0
        %p254 = scmp.lt.s32.totalorder %s20, 1
        %s255 = scalar_select %p254, %s20, 1
        %s256 = smul.addr %s253, 2
        %s257 = sadd.s32 %s255, %s256
        %s258 = smul.addr %s257, 2
        %s259 = scalar_lea.vmem %s3, %s258
        %s260 = smul.u32 2, %s19
        %p261 = scmp.lt.s32.totalorder %s19, 0
        %s262 = scalar_select %p261, %s19, 0
        %p263 = scmp.lt.s32.totalorder %s20, 1
        %s264 = scalar_select %p263, %s20, 1
        %s265 = smul.addr %s262, 2
        %s266 = sadd.s32 %s264, %s265
        %s267 = smul.addr %s266, 2
        %s268 = scalar_lea.vmem %s1, %s267
        %p269 = scmp.lt.s32.totalorder %s19, 0
        %s270 = scalar_select %p269, %s19, 0
        %p271 = scmp.lt.s32.totalorder %s20, 1
        %s272 = scalar_select %p271, %s20, 1
        %s273 = smul.addr %s270, 2
        %s274 = sadd.s32 %s272, %s273
        %s275 = smul.addr %s274, 2
        %s276 = scalar_lea.vmem %s2, %s275
        %p277 = scmp.lt.s32.totalorder %s19, 0
        %s278 = scalar_select %p277, %s19, 0
        %p279 = scmp.lt.s32.totalorder %s20, 1
        %s280 = scalar_select %p279, %s20, 1
        %s281 = smul.addr %s278, 2
        %s282 = sadd.s32 %s280, %s281
        %s283 = smul.addr %s282, 2
        %s284 = scalar_lea.vmem %s3, %s283
        %v285 = vld [vmem:[%s220] sm:$0x1]
        %v286 = vld [vmem:[%s220 + $0x4] sm:$0x1]
        %v289 = vrot.slane %v286, 7
        %vm290 = vcmask 1041409
        %v291 = vsel %vm290, %v289, %v285
        %293 = vst [vmem:[%s268] sm:$0x3] %v291
        %v294 = vld [vmem:[%s220 + $0x1] sm:$0x1]
        %v295 = vld [vmem:[%s220 + $0x5] sm:$0x1]
        %v298 = vrot.slane %v295, 7
        %v299 = vsel %vm290, %v298, %v294
        %301 = vst [vmem:[%s276] sm:$0x3] %v299
        %v302 = vld [vmem:[%s220 + $0x2] sm:$0x1]
        %v303 = vld [vmem:[%s220 + $0x6] sm:$0x1]
        %v306 = vrot.slane %v303, 7
        %v307 = vsel %vm290, %v306, %v302
        %309 = vst [vmem:[%s284] sm:$0x3] %v307
        %p310 = scmp.lt.s32.totalorder %s19, 0
        %s311 = scalar_select %p310, %s19, 0
        %p312 = scmp.lt.s32.totalorder %s20, 1
        %s313 = scalar_select %p312, %s20, 1
        %s314 = smul.addr %s311, 2
        %s315 = sadd.s32 %s313, %s314
        %s316 = smul.addr %s315, 2
        %s317 = scalar_lea.vmem %s1, %s316
        %p318 = scmp.lt.s32.totalorder %s19, 0
        %s319 = scalar_select %p318, %s19, 0
        %p320 = scmp.lt.s32.totalorder %s20, 1
        %s321 = scalar_select %p320, %s20, 1
        %s322 = smul.addr %s319, 2
        %s323 = sadd.s32 %s321, %s322
        %s324 = smul.addr %s323, 2
        %s325 = scalar_lea.vmem %s2, %s324
        %p326 = scmp.lt.s32.totalorder %s19, 0
        %s327 = scalar_select %p326, %s19, 0
        %p328 = scmp.lt.s32.totalorder %s20, 1
        %s329 = scalar_select %p328, %s20, 1
        %s330 = smul.addr %s327, 2
        %s331 = sadd.s32 %s329, %s330
        %s332 = smul.addr %s331, 2
        %s333 = scalar_lea.vmem %s3, %s332
        // Predicated region
        $region66: #{split_cat_forward.1} parent=60 // pred_check
          %p334 = pneg %p75
        $region67: #{split_cat_forward.1} parent=60 // pred_check_branch
          %336 = sbr.rel (%p334) target = $region69
        $region68: #{split_cat_forward.1} parent=60 // pred_region
          _
        $region69: #{split_cat_forward.1} parent=60 // pred_fallthru
          _
        // Predicated region
        $region70: #{split_cat_forward.1} parent=60 // pred_check
          %p337 = pneg %p103
        $region71: #{split_cat_forward.1} parent=60 // pred_check_branch
          %339 = sbr.rel (%p337) target = $region73
        $region72: #{split_cat_forward.1} parent=60 // pred_region
          _
        $region73: #{split_cat_forward.1} parent=60 // pred_fallthru
          _
        // Predicated region
        $region74: #{split_cat_forward.1} parent=60 // pred_check
          %p340 = pneg %p131
        $region75: #{split_cat_forward.1} parent=60 // pred_check_branch
          %342 = sbr.rel (%p340) target = $region77
        $region76: #{split_cat_forward.1} parent=60 // pred_region
          _
        $region77: #{split_cat_forward.1} parent=60 // pred_fallthru
          _
      $region61: #{split_cat_forward.1} parent=5 // pred_fallthru
        _
      %p343 = scmp.le.s32.totalorder 2, %s10
      // Predicated region
      $region78: #{split_cat_forward.1} parent=5 // pred_check
        %p344 = pneg %p343
      $region79: #{split_cat_forward.1} parent=5 // pred_check_branch
        %346 = sbr.rel (%p344) target = $region81
      $region80: #{split_cat_forward.1} parent=5 // pred_region
        %s347 = ssub.s32 %s10, 2
        // Predicated region
        $region82: #{split_cat_forward.1} parent=80 // pred_check
          %p348 = pneg %p81
        $region83: #{split_cat_forward.1} parent=80 // pred_check_branch
          %350 = sbr.rel (%p348) target = $region85
        $region84: #{split_cat_forward.1} parent=80 // pred_region
          %p351 = scmp.lt.s32.totalorder %s21, 0
          %s352 = scalar_select %p351, %s21, 0
          %p353 = scmp.lt.s32.totalorder %s22, 1
          %s354 = scalar_select %p353, %s22, 1
          %s355 = smul.addr %s352, 2
          %s356 = sadd.s32 %s354, %s355
          %s357 = smul.addr %s356, 2
          %s358 = scalar_lea.vmem %s1, %s357
        $region85: #{split_cat_forward.1} parent=80 // pred_fallthru
          _
        // Predicated region
        $region86: #{split_cat_forward.1} parent=80 // pred_check
          %p359 = pneg %p109
        $region87: #{split_cat_forward.1} parent=80 // pred_check_branch
          %361 = sbr.rel (%p359) target = $region89
        $region88: #{split_cat_forward.1} parent=80 // pred_region
          %p362 = scmp.lt.s32.totalorder %s21, 0
          %s363 = scalar_select %p362, %s21, 0
          %p364 = scmp.lt.s32.totalorder %s22, 1
          %s365 = scalar_select %p364, %s22, 1
          %s366 = smul.addr %s363, 2
          %s367 = sadd.s32 %s365, %s366
          %s368 = smul.addr %s367, 2
          %s369 = scalar_lea.vmem %s2, %s368
        $region89: #{split_cat_forward.1} parent=80 // pred_fallthru
          _
        // Predicated region
        $region90: #{split_cat_forward.1} parent=80 // pred_check
          %p370 = pneg %p137
        $region91: #{split_cat_forward.1} parent=80 // pred_check_branch
          %372 = sbr.rel (%p370) target = $region93
        $region92: #{split_cat_forward.1} parent=80 // pred_region
          %p373 = scmp.lt.s32.totalorder %s21, 0
          %s374 = scalar_select %p373, %s21, 0
          %p375 = scmp.lt.s32.totalorder %s22, 1
          %s376 = scalar_select %p375, %s22, 1
          %s377 = smul.addr %s374, 2
          %s378 = sadd.s32 %s376, %s377
          %s379 = smul.addr %s378, 2
          %s380 = scalar_lea.vmem %s3, %s379
        $region93: #{split_cat_forward.1} parent=80 // pred_fallthru
          _
      $region81: #{split_cat_forward.1} parent=5 // pred_fallthru
        _
    $region6: #{split_cat_forward.1} parent=1 // loop_footer
      %s14 = sadd.s32 1, %s10
    $region7: #{split_cat_forward.1} parent=1 // loop_footer_branch
      %9 = sbr.rel target = $region3
    $region8: #{split_cat_forward.1} parent=1 // loop_exit
      _

</llo_original>
